<compile_context>
chip_gen: v5e
topology: v5e:2x2
jax: 0.10.0
libtpu: 0.0.40
codegen_flags: <defaults>
</compile_context>

<pallas_src>
import jax
import jax.numpy as jnp
from jax.experimental import pallas as pl
from jax.experimental.pallas import tpu as pltpu  # noqa: F401  (kept for easy CompilerParams tuning)

LANE = 128  # TPU lane width: pad the tiny z_dim output up to this for dense stores.


def encoder_kernel(x_ref, w1_ref, w2_ref, b_ref, o_ref):
    H = w1_ref.shape[1]
    Zp = o_ref.shape[1]
    b = b_ref[...]  # [2, max(H, Zp)] f32: row 0 = b1 (padded), row 1 = b2 (padded)

    # first_linear on cat([features, reference_features], 1): the concat was done
    # in the wrapper, so this is a single bf16 MXU matmul with f32 accumulation.
    h = jnp.dot(x_ref[...], w1_ref[...], preferred_element_type=jnp.float32)
    h = h + b[0:1, :H]

    # self.linear is an empty nn.Sequential for encoder_size=[H] -> identity.

    # final_linear: W2/b2 were zero-padded from Z to Zp lanes, so the extra
    # output lanes are exactly zero and get sliced away in the wrapper.
    z = jnp.dot(h.astype(w2_ref.dtype), w2_ref[...],
                preferred_element_type=jnp.float32)
    o_ref[...] = (z + b[1:2, :Zp]).astype(o_ref.dtype)


def encoder_forward(features, reference_features, params):
    """features, reference_features: [B, F] float32.  Returns [B, Z] float32."""
    w1 = params["w1"]  # [2F, H]  (PyTorch first_linear.weight, pre-transposed)
    b1 = params["b1"]  # [H]
    w2 = params["w2"]  # [H, Z]   (PyTorch final_linear.weight, pre-transposed)
    b2 = params["b2"]  # [Z]

    B, F = features.shape
    H = w1.shape[1]
    Z = w2.shape[1]
    Zp = ((Z + LANE - 1) // LANE) * LANE          # lane-dense output width
    W = max(H, Zp)

    # ---- operand packing (plain XLA ops, done once per call) ---------------
    x_cat = jnp.concatenate([features, reference_features], axis=1).astype(jnp.bfloat16)
    w1_bf = w1.astype(jnp.bfloat16)
    w2_bf = jnp.zeros((H, Zp), jnp.bfloat16).at[:, :Z].set(w2.astype(jnp.bfloat16))
    b_packed = jnp.zeros((2, W), jnp.float32)
    b_packed = b_packed.at[0, :H].set(b1)
    b_packed = b_packed.at[1, :Z].set(b2)

    full = lambda shape: pl.BlockSpec(shape, lambda: tuple(0 for _ in shape))

    flops = 2 * B * (2 * F) * H + 2 * B * H * Zp
    bytes_accessed = (x_cat.size * 2 + w1_bf.size * 2 + w2_bf.size * 2
                      + b_packed.size * 4 + B * Zp * 4)

    out = pl.pallas_call(
        encoder_kernel,
        out_shape=jax.ShapeDtypeStruct((B, Zp), jnp.float32),
        in_specs=[
            full((B, 2 * F)),   # concatenated activations (bf16)
            full((2 * F, H)),   # W1 (bf16, pre-transposed)
            full((H, Zp)),      # W2 (bf16, pre-transposed, lane-padded)
            full((2, W)),       # packed biases (f32)
        ],
        out_specs=full((B, Zp)),
        cost_estimate=pl.CostEstimate(
            flops=flops, transcendentals=0, bytes_accessed=bytes_accessed),
    )(x_cat, w1_bf, w2_bf, b_packed)

    return out[:, :Z]


def make_params(key, feature_dim, hidden, z_dim):
    """Deterministic synthetic parameters (PyTorch-Linear-like uniform init)."""
    k1, k2, k3, k4 = jax.random.split(key, 4)
    in1 = 2 * feature_dim
    bound1 = 1.0 / jnp.sqrt(in1)
    bound2 = 1.0 / jnp.sqrt(hidden)
    # Stored transposed relative to PyTorch ([in, out]) so y = x @ W + b.
    w1_t = jax.random.uniform(k1, (in1, hidden), jnp.float32, -bound1, bound1)
    b1 = jax.random.uniform(k2, (hidden,), jnp.float32, -bound1, bound1)
    w2_t = jax.random.uniform(k3, (hidden, z_dim), jnp.float32, -bound2, bound2)
    b2 = jax.random.uniform(k4, (z_dim,), jnp.float32, -bound2, bound2)
    return {"w1": w1_t, "b1": b1, "w2": w2_t, "b2": b2}


def encoder_reference(features, reference_features, params, match_kernel_dtypes=True):
    x = jnp.concatenate([features, reference_features], axis=1)
    w1, w2 = params["w1"], params["w2"]
    if match_kernel_dtypes:
        # Same bf16-operand / f32-accumulate pipeline as the kernel.
        h = jnp.dot(x.astype(jnp.bfloat16), w1.astype(jnp.bfloat16),
                    preferred_element_type=jnp.float32) + params["b1"]
        return jnp.dot(h.astype(jnp.bfloat16), w2.astype(jnp.bfloat16),
                       preferred_element_type=jnp.float32) + params["b2"]
    h = x @ w1 + params["b1"]
    return h @ w2 + params["b2"]


if __name__ == "__main__":
    # Small shapes consistent with the module: batch=8, feature_dim=32,
    # encoder_size=[64], z_dim=16.
    B, F, H, Z = 8, 32, 64, 16

    key = jax.random.PRNGKey(0)
    kx, kr, kp = jax.random.split(key, 3)
    features = jax.random.normal(kx, (B, F), jnp.float32)
    reference_features = jax.random.normal(kr, (B, F), jnp.float32)
    params = make_params(kp, F, H, Z)

    out = jax.block_until_ready(encoder_forward(features, reference_features, params))

    ref_matched = encoder_reference(features, reference_features, params, True)
    ref_f32 = encoder_reference(features, reference_features, params, False)

    assert out.shape == (B, Z)
    assert jnp.allclose(out, ref_matched, atol=1e-3, rtol=1e-3)
    # bf16 weights/activations vs. full-f32 math: loose sanity bound only.
    assert jnp.allclose(out, ref_f32, atol=1e-1, rtol=1e-1)

    print("KERNEL_OK")
</pallas_src>

<mosaic_0001>
module attributes {stable_mosaic.version = 11 : i64} {
  func.func @encoder_kernel(%arg0: memref<8x64xbf16, #tpu.memory_space<vmem>>, %arg1: memref<64x64xbf16, #tpu.memory_space<vmem>>, %arg2: memref<64x128xbf16, #tpu.memory_space<vmem>>, %arg3: memref<2x128xf32, #tpu.memory_space<vmem>>, %arg4: memref<8x128xf32, #tpu.memory_space<vmem>>) attributes {dimension_semantics = [], scalar_prefetch = 0 : i64, scratch_operands = 0 : i64, tpu.core_type = #tpu.core_type<tc>} {
    %c0 = arith.constant 0 : index
    %c0_0 = arith.constant 0 : index
    %0 = vector.load %arg3[%c0, %c0_0] : memref<2x128xf32, #tpu.memory_space<vmem>>, vector<2x128xf32>
    %c0_1 = arith.constant 0 : index
    %c0_2 = arith.constant 0 : index
    %1 = vector.load %arg0[%c0_1, %c0_2] : memref<8x64xbf16, #tpu.memory_space<vmem>>, vector<8x64xbf16>
    %c0_3 = arith.constant 0 : index
    %c0_4 = arith.constant 0 : index
    %2 = vector.load %arg1[%c0_3, %c0_4] : memref<64x64xbf16, #tpu.memory_space<vmem>>, vector<64x64xbf16>
    %cst = arith.constant dense<0.000000e+00> : vector<8x64xf32>
    %3 = tpu.matmul %1, %2, %cst {dimension_numbers = #tpu.dot_dimension_numbers<[1], [0], [0], [1], [0, 0, 1, 1], [], []>} : vector<8x64xbf16>, vector<64x64xbf16>, vector<8x64xf32> -> vector<8x64xf32>
    %4 = vector.extract_strided_slice %0 {offsets = [0, 0], sizes = [1, 64], strides = [1, 1]} : vector<2x128xf32> to vector<1x64xf32>
    %5 = vector.broadcast %4 : vector<1x64xf32> to vector<8x64xf32>
    %6 = arith.addf %3, %5 : vector<8x64xf32>
    %7 = arith.truncf %6 : vector<8x64xf32> to vector<8x64xbf16>
    %c0_5 = arith.constant 0 : index
    %c0_6 = arith.constant 0 : index
    %8 = vector.load %arg2[%c0_5, %c0_6] : memref<64x128xbf16, #tpu.memory_space<vmem>>, vector<64x128xbf16>
    %cst_7 = arith.constant dense<0.000000e+00> : vector<8x128xf32>
    %9 = tpu.matmul %7, %8, %cst_7 {dimension_numbers = #tpu.dot_dimension_numbers<[1], [0], [0], [1], [0, 0, 1, 1], [], []>} : vector<8x64xbf16>, vector<64x128xbf16>, vector<8x128xf32> -> vector<8x128xf32>
    %10 = vector.extract_strided_slice %0 {offsets = [1, 0], sizes = [1, 128], strides = [1, 1]} : vector<2x128xf32> to vector<1x128xf32>
    %11 = vector.broadcast %10 : vector<1x128xf32> to vector<8x128xf32>
    %12 = arith.addf %9, %11 : vector<8x128xf32>
    %c0_8 = arith.constant 0 : index
    %c0_9 = arith.constant 0 : index
    %13 = vector.load %arg4[%c0_8, %c0_9] : memref<8x128xf32, #tpu.memory_space<vmem>>, vector<8x128xf32>
    tpu.vector_store %arg4[%c0_8, %c0_9], %12 {strides = array<i32>} : memref<8x128xf32, #tpu.memory_space<vmem>>, vector<8x128xf32>,
    return
  }
}

</mosaic_0001>

<llo_original>
// kernel: tpu_custom_call.1
$region0: #{tpu_custom_call.1}
  #allocation0 [shape = 'u32[]', space=smem, size = 0x4, offset = 0x4, fixed_abs, tag = 'smem constant byte address 0x4 - core index']
  #allocation1 [shape = 'u32[72,128]{1,0:T(1,128)}', space=vmem, size = 0x9000, scoped, tag = 'internal scratch']
  %s0 = inlined_call_operand.hbm [shape: bf16[8,64], index: 0, kind: input, shape index: {}]
  %s1 = inlined_call_operand.hbm [shape: bf16[64,64], index: 1, kind: input, shape index: {}]
  %s2 = inlined_call_operand.hbm [shape: bf16[64,128], index: 2, kind: input, shape index: {}]
  %s3 = inlined_call_operand.vmem [shape: f32[2,128], index: 3, kind: input, shape index: {}]
  %s4 = inlined_call_operand.hbm [shape: f32[8,128], index: 4, kind: output, shape index: {}]
  %s5 = sld [smem:[#allocation0]]
  $region38: #{tpu_custom_call.1} parent=0
    _
  %s7 = ssub.s32 1, %s5
  %s8 = scalar_select 0, %s7, %s5
  $region1: #{tpu_custom_call.1} parent=0
    #allocation2 [shape = 'u8[2048]{0}', space=vmem, size = 0x800, scoped, tag = 'input window, operand 0, single buffered']
    #allocation3 [shape = 's32[1]{0}', space=sflag, size = 0x4, scoped, tag = 'scoped memory for tpu_custom_call.1']
    #allocation4 [shape = 's32[1]{0}', space=sflag, size = 0x4, scoped, tag = 'scoped memory for tpu_custom_call.1']
    #allocation5 [shape = 'u8[16384]{0}', space=vmem, size = 0x4000, scoped, tag = 'input window, operand 1, single buffered']
    #allocation6 [shape = 's32[1]{0}', space=sflag, size = 0x4, scoped, tag = 'scoped memory for tpu_custom_call.1']
    #allocation7 [shape = 'u8[16384]{0}', space=vmem, size = 0x4000, scoped, tag = 'input window, operand 2, single buffered']
    #allocation8 [shape = 'u8[4096]{0}', space=vmem, size = 0x1000, scoped, tag = 'output window, operand 0, single buffered']
    %9 = vsyncpa [#allocation3], 0
    %10 = vsyncpa [#allocation6], 0
    %11 = vsyncpa [#allocation4], 0
    // Predicated region
    $region2: #{tpu_custom_call.1} parent=1 // pred_check
      _
    $region3: #{tpu_custom_call.1} parent=1 // pred_check_branch
      %13 = sbr.rel (0) target = $region5
    $region4: #{tpu_custom_call.1} parent=1 // pred_region
      %15 = vsyncadd [#allocation3], 0
      %s17 = sshll.u32 %s0, 4
      %s18 = int_to_ptr.hbm [resolvable:$true] %s17
      %s19 = sshll.u32 [#allocation2], 4
      %s20 = int_to_ptr.vmem [resolvable:$true] %s19
      %22 = dma.hbm_to_vmem [thread:$0]  %s18, 64, %s20, [#allocation3]
    $region5: #{tpu_custom_call.1} parent=1 // pred_fallthru
      _
    // Predicated region
    $region6: #{tpu_custom_call.1} parent=1 // pred_check
      _
    $region7: #{tpu_custom_call.1} parent=1 // pred_check_branch
      %24 = sbr.rel (0) target = $region9
    $region8: #{tpu_custom_call.1} parent=1 // pred_region
      %26 = vsyncadd [#allocation6], 0
      %s27 = sshll.u32 %s1, 4
      %s28 = int_to_ptr.hbm [resolvable:$true] %s27
      %s29 = sshll.u32 [#allocation5], 4
      %s30 = int_to_ptr.vmem [resolvable:$true] %s29
      %35 = dma.hbm_to_vmem [thread:$0]  %s28, 512, %s30, [#allocation6], 64, 64, 4
    $region9: #{tpu_custom_call.1} parent=1 // pred_fallthru
      _
    // Predicated region
    $region10: #{tpu_custom_call.1} parent=1 // pred_check
      _
    $region11: #{tpu_custom_call.1} parent=1 // pred_check_branch
      %37 = sbr.rel (0) target = $region13
    $region12: #{tpu_custom_call.1} parent=1 // pred_region
      %39 = vsyncadd [#allocation6], 0
      %s40 = sshll.u32 %s2, 4
      %s41 = int_to_ptr.hbm [resolvable:$true] %s40
      %s42 = sshll.u32 [#allocation7], 4
      %s43 = int_to_ptr.vmem [resolvable:$true] %s42
      %48 = dma.hbm_to_vmem [thread:$0]  %s41, 512, %s43, [#allocation6], 64, 64, 4
    $region13: #{tpu_custom_call.1} parent=1 // pred_fallthru
      _
    // Predicated region
    $region14: #{tpu_custom_call.1} parent=1 // pred_check
      _
    $region15: #{tpu_custom_call.1} parent=1 // pred_check_branch
      %50 = sbr.rel (0) target = $region17
    $region16: #{tpu_custom_call.1} parent=1 // pred_region
      _
    $region17: #{tpu_custom_call.1} parent=1 // pred_fallthru
      _
    // Predicated region
    $region18: #{tpu_custom_call.1} parent=1 // pred_check
      _
    $region19: #{tpu_custom_call.1} parent=1 // pred_check_branch
      %52 = sbr.rel (0) target = $region21
    $region20: #{tpu_custom_call.1} parent=1 // pred_region
      %54 = dma.done [#allocation3], 64
    $region21: #{tpu_custom_call.1} parent=1 // pred_fallthru
      _
    // Predicated region
    $region22: #{tpu_custom_call.1} parent=1 // pred_check
      _
    $region23: #{tpu_custom_call.1} parent=1 // pred_check_branch
      %56 = sbr.rel (0) target = $region25
    $region24: #{tpu_custom_call.1} parent=1 // pred_region
      %58 = dma.done [#allocation6], 512
    $region25: #{tpu_custom_call.1} parent=1 // pred_fallthru
      _
    // Predicated region
    $region26: #{tpu_custom_call.1} parent=1 // pred_check
      _
    $region27: #{tpu_custom_call.1} parent=1 // pred_check_branch
      %60 = sbr.rel (0) target = $region29
    $region28: #{tpu_custom_call.1} parent=1 // pred_region
      %62 = dma.done [#allocation6], 512
    $region29: #{tpu_custom_call.1} parent=1 // pred_fallthru
      _
    %v64 = vld [vmem:[%s3] sm:$0x3]
    %v65 = vld [vmem:[#allocation2] sm:$0xf]
    %v66 = vld [vmem:[#allocation5] sm:$0xf]
    %v67 = vld [vmem:[#allocation5 + $0x4] sm:$0xf]
    %v68 = vld [vmem:[#allocation5 + $0x8] sm:$0xf]
    %v69 = vld [vmem:[#allocation5 + $0xc] sm:$0xf]
    %v70 = vld [vmem:[#allocation5 + $0x10] sm:$0xf]
    %v71 = vld [vmem:[#allocation5 + $0x14] sm:$0xf]
    %v72 = vld [vmem:[#allocation5 + $0x18] sm:$0xf]
    %v73 = vld [vmem:[#allocation5 + $0x1c] sm:$0xf]
    %v74 = vperm.slane %v64, 0
    %v83 = vunpack.c.l.b16 %v66
    %v84 = vunpack.c.l.b16 %v67
    %v85 = vunpack.c.l.b16 %v68
    %v86 = vunpack.c.l.b16 %v69
    %v87 = vunpack.c.l.b16 %v70
    %v88 = vunpack.c.l.b16 %v71
    %v89 = vunpack.c.l.b16 %v72
    %v90 = vunpack.c.l.b16 %v73
    %v91 = vpack.c.b16 %v84, %v83
    %v92 = vpack.c.b16 %v86, %v85
    %v93 = vpack.c.b16 %v88, %v87
    %v94 = vpack.c.b16 %v90, %v89
    %vm99 = vcmask 523264
    %v101 = vsel %vm99, %v65, 0
    %103 = vmatpush.bf16.msra.mxu0 0
    %104 = vmatpush.bf16.msra.mxu0 0
    %105 = vmatpush.bf16.msra.mxu0 0
    %106 = vmatpush.bf16.msra.mxu0 0
    %107 = vmatpush.bf16.msra.mxu0 %v94
    %108 = vmatpush.bf16.msra.mxu0 %v93
    %109 = vmatpush.bf16.msra.mxu0 %v92
    %110 = vmatpush.bf16.msra.mxu0 %v91
    %111 = vmatmul.bf16.gmra.mxu0 %v101
    %v112 = vpop.f32.mrf.mxu0
    %v113 = vadd.f32 %v74, %v112
    %v114 = vpop.f32.mrf.mxu0
    %115 = vdwg.mxu0
    %v116 = vpack.c.bf16 %v113, %v113
    %v117 = vld [vmem:[#allocation7] sm:$0xf]
    %v118 = vld [vmem:[#allocation7 + $0x4] sm:$0xf]
    %v119 = vld [vmem:[#allocation7 + $0x8] sm:$0xf]
    %v120 = vld [vmem:[#allocation7 + $0xc] sm:$0xf]
    %v121 = vld [vmem:[#allocation7 + $0x10] sm:$0xf]
    %v122 = vld [vmem:[#allocation7 + $0x14] sm:$0xf]
    %v123 = vld [vmem:[#allocation7 + $0x18] sm:$0xf]
    %v124 = vld [vmem:[#allocation7 + $0x1c] sm:$0xf]
    %v125 = vperm.slane %v64, 1
    %v134 = vunpack.c.l.b16 %v117
    %v135 = vunpack.c.l.b16 %v118
    %v136 = vunpack.c.l.b16 %v119
    %v137 = vunpack.c.l.b16 %v120
    %v138 = vunpack.c.l.b16 %v121
    %v139 = vunpack.c.l.b16 %v122
    %v140 = vunpack.c.l.b16 %v123
    %v141 = vunpack.c.l.b16 %v124
    %v142 = vpack.c.b16 %v135, %v134
    %v143 = vpack.c.b16 %v137, %v136
    %v144 = vpack.c.b16 %v139, %v138
    %v145 = vpack.c.b16 %v141, %v140
    %v151 = vsel %vm99, %v116, 0
    %153 = vmatpush.bf16.msra.mxu0 0
    %154 = vmatpush.bf16.msra.mxu0 0
    %155 = vmatpush.bf16.msra.mxu0 0
    %156 = vmatpush.bf16.msra.mxu0 0
    %157 = vmatpush.bf16.msra.mxu0 %v145
    %158 = vmatpush.bf16.msra.mxu0 %v144
    %159 = vmatpush.bf16.msra.mxu0 %v143
    %160 = vmatpush.bf16.msra.mxu0 %v142
    %161 = vmatmul.bf16.gmra.mxu0 %v151
    %v162 = vpop.f32.mrf.mxu0
    %v163 = vadd.f32 %v125, %v162
    %v164 = vpop.f32.mrf.mxu0
    %165 = vdwg.mxu0
    %166 = vst [vmem:[#allocation8] sm:$0xff] %v163
    // Predicated region
    $region30: #{tpu_custom_call.1} parent=1 // pred_check
      _
    $region31: #{tpu_custom_call.1} parent=1 // pred_check_branch
      %168 = sbr.rel (0) target = $region33
    $region32: #{tpu_custom_call.1} parent=1 // pred_region
      %170 = vsyncadd [#allocation4], 0
      %s172 = sshll.u32 [#allocation8], 4
      %s173 = int_to_ptr.vmem [resolvable:$true] %s172
      %s174 = sshll.u32 %s4, 4
      %s175 = int_to_ptr.hbm [resolvable:$true] %s174
      %177 = dma.vmem_to_hbm [thread:$0]  %s173, 128, %s175, [#allocation4]
    $region33: #{tpu_custom_call.1} parent=1 // pred_fallthru
      _
    // Predicated region
    $region34: #{tpu_custom_call.1} parent=1 // pred_check
      _
    $region35: #{tpu_custom_call.1} parent=1 // pred_check_branch
      %179 = sbr.rel (0) target = $region37
    $region36: #{tpu_custom_call.1} parent=1 // pred_region
      %181 = dma.done [#allocation4], 128
    $region37: #{tpu_custom_call.1} parent=1 // pred_fallthru
      _
    %182 = vsyncpa [#allocation3], 1
    %183 = vsyncpa [#allocation6], 1
    %184 = vsyncpa [#allocation4], 1

</llo_original>
